<compile_context>
chip_gen: v7x
topology: tpu7x:2x2x1
jax: 0.10.0
libtpu: 0.0.40
codegen_flags: <defaults>
</compile_context>

<pallas_src>
import math
import jax
import jax.numpy as jnp
from jax import lax
from jax.experimental import pallas as pl
from jax.experimental.pallas import tpu as pltpu


def _round_up(x, m):
    return (x + m - 1) // m * m


def _dynconv_matmul_kernel(w_ref, b_ref, p_ref, o_ref):
    # w_ref: (Coutp, Pp)  bf16  -- per-sample aggregated conv weight (resident)
    # b_ref: (Coutp, 1)   f32   -- per-sample aggregated bias
    # p_ref: (Pp, TL)     bf16  -- im2col patch tile
    # o_ref: (Coutp, TL)  f32   -- lane-dense output tile (TL multiple of 128)
    acc = jnp.dot(w_ref[...], p_ref[...], preferred_element_type=jnp.float32)
    o_ref[...] = (acc + b_ref[...]).astype(o_ref.dtype)


def dynamic_conv_forward(x, params, *, num_kernel, kernel_size, stride, padding,
                         temp=30.0):
    """x: (B, Cin, H, W) float32, NCHW.  Returns (B, Cout, Hout, Wout)."""
    B, Cin, H, W = x.shape
    w1, b1, w2, b2, weight, bias = (params[k] for k in
                                    ("w1", "b1", "w2", "b2", "weight", "bias"))
    K, Cout, _, kh, kw = weight.shape
    assert K == num_kernel and kh == kw == kernel_size

    Hout = (H + 2 * padding - kh) // stride + 1
    Wout = (W + 2 * padding - kw) // stride + 1
    L = Hout * Wout
    P = Cin * kh * kw

    # ---- attention MLP (tiny, N=1 matvecs): plain XLA, batched over B ----
    pooled = x.mean(axis=(2, 3))                                 # (B, Cin)
    h = jnp.maximum(pooled @ w1.T + b1, 0.0)                     # (B, hidden)
    pi = jax.nn.softmax((h @ w2.T + b2) / temp, axis=-1)         # (B, K)

    # ---- per-sample aggregated conv kernel / bias (tiny einsum): XLA ----
    w_flat = weight.reshape(K, Cout, P)                          # (K, Cout, P)
    w_agg = jnp.einsum("bk,kcp->bcp", pi, w_flat)                # (B, Cout, P) f32
    b_agg = pi @ bias                                            # (B, Cout)

    # ---- im2col (layout only) -> (B, P, L); Cin-major, (di,dj)-minor ----
    x_pad = jnp.pad(x, ((0, 0), (0, 0), (padding, padding), (padding, padding)))
    cols = []
    for di in range(kh):
        for dj in range(kw):
            cols.append(x_pad[:, :,
                              di:di + stride * Hout:stride,
                              dj:dj + stride * Wout:stride])     # (B, Cin, Hout, Wout)
    patches = jnp.stack(cols, axis=2).reshape(B, P, L)           # (B, P, L)

    # ---- alignment padding: P -> mult of 128 (lanes of w), Cout -> mult of 8 ----
    Pp = _round_up(P, 128)
    Coutp = _round_up(Cout, 8)

    # ---- pick lane tile TL under a ~48 MiB VMEM budget (safe on v7x 64 MiB) ----
    def vmem_est(tl):
        return (2 * Pp * tl * 2          # patches tile, bf16, double-buffered
                + 2 * Coutp * tl * 4     # output tile,  f32,  double-buffered
                + 2 * Coutp * Pp * 2     # aggregated weight, bf16
                + 2 * Coutp * 4)         # bias
    budget = 48 << 20
    TL = 2048
    while TL > 128 and vmem_est(TL) > budget:
        TL //= 2
    TL = min(TL, _round_up(L, 128))
    Lp = _round_up(L, TL)

    patches_p = jnp.pad(patches.astype(jnp.bfloat16),
                        ((0, 0), (0, Pp - P), (0, Lp - L)))       # (B, Pp, Lp) bf16
    w_agg_p = jnp.pad(w_agg.astype(jnp.bfloat16),
                      ((0, 0), (0, Coutp - Cout), (0, Pp - P)))   # (B, Coutp, Pp) bf16
    b_agg_p = jnp.pad(b_agg, ((0, 0), (0, Coutp - Cout)))[:, :, None]  # (B, Coutp, 1)

    grid = (B, Lp // TL)
    out = pl.pallas_call(
        _dynconv_matmul_kernel,
        out_shape=jax.ShapeDtypeStruct((B, Coutp, Lp), jnp.float32),
        grid_spec=pltpu.PrefetchScalarGridSpec(
            num_scalar_prefetch=0,
            grid=grid,
            in_specs=[
                pl.BlockSpec((None, Coutp, Pp), lambda b, l: (b, 0, 0)),  # w_agg
                pl.BlockSpec((None, Coutp, 1), lambda b, l: (b, 0, 0)),   # b_agg
                pl.BlockSpec((None, Pp, TL), lambda b, l: (b, 0, l)),     # patches
            ],
            out_specs=pl.BlockSpec((None, Coutp, TL), lambda b, l: (b, 0, l)),
        ),
        compiler_params=pltpu.CompilerParams(
            dimension_semantics=("parallel", "parallel"),
            vmem_limit_bytes=64 << 20),
    )(w_agg_p, b_agg_p, patches_p)

    # (B, Coutp, Lp) -> (B, Cout, Hout, Wout)  (no transpose needed)
    return out[:, :Cout, :L].reshape(B, Cout, Hout, Wout)


def init_params(key, in_channel, out_channel, num_kernel, kernel_size):
    """Deterministic synthetic init matching the module's parameter shapes."""
    hidden = max(1, in_channel // 4)
    k1, k2, k3, k4, k5, k6 = jax.random.split(key, 6)
    fan_in_w = in_channel * kernel_size * kernel_size
    bound_w = math.sqrt(6.0 / fan_in_w) / math.sqrt(1 + 5.0)  # kaiming_uniform a=sqrt(5)
    bound_b = 1.0 / math.sqrt(fan_in_w)
    params = {
        "w1": jax.random.uniform(k1, (hidden, in_channel), jnp.float32, -0.5, 0.5),
        "b1": jax.random.uniform(k2, (hidden,), jnp.float32, -0.5, 0.5),
        "w2": jax.random.uniform(k3, (num_kernel, hidden), jnp.float32, -0.5, 0.5),
        "b2": jax.random.uniform(k4, (num_kernel,), jnp.float32, -0.5, 0.5),
        "weight": jax.random.uniform(
            k5, (num_kernel, out_channel, in_channel, kernel_size, kernel_size),
            jnp.float32, -bound_w, bound_w),
        "bias": jax.random.uniform(
            k6, (num_kernel, out_channel), jnp.float32, -bound_b, bound_b),
    }
    return params


def _reference(x, params, *, stride, padding, temp):
    """Plain-JAX f32 reference mirroring the PyTorch forward (for verification)."""
    w1, b1, w2, b2, weight, bias = (params[k] for k in
                                    ("w1", "b1", "w2", "b2", "weight", "bias"))
    B = x.shape[0]
    pooled = x.mean(axis=(2, 3))                                  # (B, Cin)
    h = jnp.maximum(pooled @ w1.T + b1, 0.0)
    pi = jax.nn.softmax((h @ w2.T + b2) / temp, axis=-1)          # (B, K)
    outs = []
    for b in range(B):
        w_b = jnp.einsum("k,koihw->oihw", pi[b], weight)          # (Cout,Cin,kh,kw)
        b_b = pi[b] @ bias                                        # (Cout,)
        o = lax.conv_general_dilated(
            x[b:b + 1], w_b, window_strides=(stride, stride),
            padding=[(padding, padding), (padding, padding)],
            dimension_numbers=("NCHW", "OIHW", "NCHW"))
        outs.append(o[0] + b_b[:, None, None])
    return jnp.stack(outs, axis=0)


if __name__ == "__main__":
    B, Cin, Cout = 2, 4, 8
    H = W = 16
    num_kernel, kernel_size, stride, padding, temp = 3, 3, 1, 1, 30.0

    key = jax.random.PRNGKey(0)
    kx, kp = jax.random.split(key)
    x = jax.random.normal(kx, (B, Cin, H, W), jnp.float32)
    params = init_params(kp, Cin, Cout, num_kernel, kernel_size)

    out = dynamic_conv_forward(
        x, params, num_kernel=num_kernel, kernel_size=kernel_size,
        stride=stride, padding=padding, temp=temp)
    out = jax.block_until_ready(out)

    ref = _reference(x, params, stride=stride, padding=padding, temp=temp)
    assert out.shape == (B, Cout, H, W), out.shape
    # bf16 matmul (f32 accumulation) vs f32 reference -> looser tolerance.
    assert jnp.allclose(out, ref, atol=2e-2, rtol=2e-2), \
        float(jnp.max(jnp.abs(out - ref)))
    print("KERNEL_OK")
</pallas_src>

<mosaic_0001>
module attributes {stable_mosaic.version = 11 : i64} {
  func.func @_dynconv_matmul_kernel(%arg0: i32, %arg1: i32, %arg2: memref<1x8x128xbf16, #tpu.memory_space<vmem>>, %arg3: memref<1x8x1xf32, #tpu.memory_space<vmem>>, %arg4: memref<1x128x256xbf16, #tpu.memory_space<vmem>>, %arg5: memref<1x8x256xf32, #tpu.memory_space<vmem>>) attributes {dimension_semantics = [#tpu.dimension_semantics<parallel>, #tpu.dimension_semantics<parallel>], iteration_bounds = array<i64: 2, 1>, scalar_prefetch = 0 : i64, scratch_operands = 0 : i64, tpu.core_type = #tpu.core_type<tc>, window_params = [{transform_indices = @transform_0, window_bounds = array<i64: 1, 8, 128>}, {transform_indices = @transform_1, window_bounds = array<i64: 1, 8, 1>}, {transform_indices = @transform_2, window_bounds = array<i64: 1, 128, 256>}, {transform_indices = @transform_3, window_bounds = array<i64: 1, 8, 256>}]} {
    %c0 = arith.constant 0 : index
    %c0_0 = arith.constant 0 : index
    %c0_1 = arith.constant 0 : index
    %0 = vector.load %arg2[%c0, %c0_0, %c0_1] : memref<1x8x128xbf16, #tpu.memory_space<vmem>>, vector<1x8x128xbf16>
    %1 = vector.shape_cast %0 : vector<1x8x128xbf16> to vector<8x128xbf16>
    %c0_2 = arith.constant 0 : index
    %c0_3 = arith.constant 0 : index
    %c0_4 = arith.constant 0 : index
    %2 = vector.load %arg4[%c0_2, %c0_3, %c0_4] : memref<1x128x256xbf16, #tpu.memory_space<vmem>>, vector<1x128x256xbf16>
    %3 = vector.shape_cast %2 : vector<1x128x256xbf16> to vector<128x256xbf16>
    %cst = arith.constant dense<0.000000e+00> : vector<8x256xf32>
    %4 = tpu.matmul %1, %3, %cst {dimension_numbers = #tpu.dot_dimension_numbers<[1], [0], [0], [1], [0, 0, 1, 1], [], []>} : vector<8x128xbf16>, vector<128x256xbf16>, vector<8x256xf32> -> vector<8x256xf32>
    %c0_5 = arith.constant 0 : index
    %c0_6 = arith.constant 0 : index
    %c0_7 = arith.constant 0 : index
    %5 = vector.load %arg3[%c0_5, %c0_6, %c0_7] : memref<1x8x1xf32, #tpu.memory_space<vmem>>, vector<1x8x1xf32>
    %6 = vector.shape_cast %5 : vector<1x8x1xf32> to vector<8x1xf32>
    %7 = vector.broadcast %6 : vector<8x1xf32> to vector<8x256xf32>
    %8 = arith.addf %4, %7 : vector<8x256xf32>
    %c0_8 = arith.constant 0 : index
    %c0_9 = arith.constant 0 : index
    %c0_10 = arith.constant 0 : index
    %9 = vector.load %arg5[%c0_8, %c0_9, %c0_10] : memref<1x8x256xf32, #tpu.memory_space<vmem>>, vector<1x8x256xf32>
    %10 = vector.shape_cast %9 : vector<1x8x256xf32> to vector<8x256xf32>
    %11 = vector.shape_cast %8 : vector<8x256xf32> to vector<1x8x256xf32>
    tpu.vector_store %arg5[%c0_8, %c0_9, %c0_10], %11 {strides = array<i32>} : memref<1x8x256xf32, #tpu.memory_space<vmem>>, vector<1x8x256xf32>,
    return
  }
  func.func @transform_0(%arg0: i32, %arg1: i32) -> (i32, i32, i32) {
    %c0_i32 = arith.constant 0 : i32
    %c0_i32_0 = arith.constant 0 : i32
    %c0_i32_1 = arith.constant 0 : i32
    return %arg0, %c0_i32, %c0_i32_0 : i32, i32, i32
  }
  func.func @transform_1(%arg0: i32, %arg1: i32) -> (i32, i32, i32) {
    %c0_i32 = arith.constant 0 : i32
    %c0_i32_0 = arith.constant 0 : i32
    %c0_i32_1 = arith.constant 0 : i32
    return %arg0, %c0_i32, %c0_i32_0 : i32, i32, i32
  }
  func.func @transform_2(%arg0: i32, %arg1: i32) -> (i32, i32, i32) {
    %c0_i32 = arith.constant 0 : i32
    %c0_i32_0 = arith.constant 0 : i32
    return %arg0, %c0_i32, %arg1 : i32, i32, i32
  }
  func.func @transform_3(%arg0: i32, %arg1: i32) -> (i32, i32, i32) {
    %c0_i32 = arith.constant 0 : i32
    %c0_i32_0 = arith.constant 0 : i32
    return %arg0, %c0_i32, %arg1 : i32, i32, i32
  }
}

</mosaic_0001>

<llo_original>
// kernel: tpu_custom_call.1
$region0: #{tpu_custom_call.1}
  #allocation0 [shape = 'u32[]', space=smem, size = 0x4, offset = 0x4, fixed_abs, tag = 'smem constant byte address 0x4 - core index']
  #allocation1 [shape = 'u32[144,128]{1,0:T(1,128)}', space=vmem, size = 0x12000, scoped, tag = 'internal scratch']
  %s0 = inlined_call_operand.hbm [shape: bf16[2,8,128], index: 0, kind: input, shape index: {}]
  %s1 = inlined_call_operand.hbm [shape: f32[2,8,1], index: 1, kind: input, shape index: {}]
  %s2 = inlined_call_operand.hbm [shape: bf16[2,128,256], index: 2, kind: input, shape index: {}]
  %s3 = inlined_call_operand.hbm [shape: f32[2,8,256], index: 3, kind: output, shape index: {}]
  %s4 = sld [smem:[#allocation0]]
  $region57: #{tpu_custom_call.1} parent=0
    _
  %s6 = ssub.s32 1, %s4
  %s7 = scalar_select 0, %s6, %s4
  $region1: #{tpu_custom_call.1} parent=0
    #allocation2 [shape = 'u8[4096]{0}', space=vmem, size = 0x1000, scoped, tag = 'input window, operand 0']
    #allocation3 [shape = 's32[2]{0}', space=sflag, size = 0x8, scoped, tag = 'scoped memory for tpu_custom_call.1']
    #allocation4 [shape = 's32[2]{0}', space=sflag, size = 0x8, scoped, tag = 'scoped memory for tpu_custom_call.1']
    #allocation5 [shape = 'u8[8192]{0}', space=vmem, size = 0x2000, scoped, tag = 'input window, operand 1']
    #allocation6 [shape = 's32[2]{0}', space=sflag, size = 0x8, scoped, tag = 'scoped memory for tpu_custom_call.1']
    #allocation7 [shape = 'u8[131072]{0}', space=vmem, size = 0x20000, scoped, tag = 'input window, operand 2']
    #allocation8 [shape = 'u8[16384]{0}', space=vmem, size = 0x4000, scoped, tag = 'output window, operand 0']
    %8 = vsyncpa [#allocation3], 0
    %s9 = scalar_lea.sflag [#allocation3], 1
    %10 = vsyncpa %s9, 0
    %11 = vsyncpa [#allocation6], 0
    %s12 = scalar_lea.sflag [#allocation6], 1
    %13 = vsyncpa %s12, 0
    %14 = vsyncpa [#allocation4], 0
    %s15 = scalar_lea.sflag [#allocation4], 1
    %16 = vsyncpa %s15, 0
    loop: start=0, step=1, limit=4
    $region2: #{tpu_custom_call.1} parent=1 // loop_pre_header
      _
    $region3: #{tpu_custom_call.1} parent=1 // loop_header
      %s18 = sphi 0, %s22
      %p19 = scmp.ge.s32.totalorder %s18, 4
      %s25 = sphi 0, %s37
      %s26 = sphi 0, %s33
      %s27 = sphi 0, %s25
      %s28 = sphi 0, %s26
      %s29 = sphi 0, %s27
      %s30 = sphi 0, %s28
      %s40 = sphi 0, %s42
      %s43 = sphi 0, %s40
      %s44 = sphi 0, %s43
      %s60 = sphi 0, %s44
      %s66 = sphi 0, %s68
      %s69 = sphi 0, %s66
      %s70 = sphi 0, %s69
      %s86 = sphi 0, %s70
      %s94 = sphi 0, %s96
      %s97 = sphi 0, %s94
      %s98 = sphi 0, %s97
      %s114 = sphi 0, %s98
      %s122 = sphi 0, %s124
      %s125 = sphi 0, %s122
      %s126 = sphi 0, %s125
      %s142 = sphi 0, %s126
    $region4: #{tpu_custom_call.1} parent=1 // loop_header_branch
      %21 = sbr.rel (%p19) target = $region8
    $region5: #{tpu_custom_call.1} parent=1 // loop_body
      %s23 = ssub.s32 %s18, 1
      %s24 = ssub.s32 %s18, 2
      %s31 = sadd.s32 1, %s26
      %p32 = scmp.ge.s32.totalorder %s31, 1
      %s33 = scalar_select %p32, 0, %s31
      %s34 = sadd.s32 1, %s25
      %s35 = scalar_select %p32, %s34, %s25
      %p36 = scmp.ge.s32.totalorder %s35, 2
      %s37 = scalar_select %p36, 0, %s35
      %s38 = ssub.s32 %s25, %s37
      %p39 = scmp.eq.s32.totalorder %s38, 0
      %s41 = sadd.s32 %s40, 1
      %s42 = scalar_select %p39, %s40, %s41
      %p45 = pneg %p39
      %p46 = scmp.eq.s32.totalorder %s18, 1
      %p47 = por %p45, %p46
      %p48 = scmp.ne.s32.totalorder %s40, %s43
      %p49 = scmp.eq.s32.totalorder %s18, 0
      %p50 = por %p48, %p49
      %p51 = scmp.ne.s32.totalorder %s40, %s43
      %p52 = scmp.eq.s32.totalorder %s23, 1
      %p53 = por %p51, %p52
      %p54 = scmp.ne.s32.totalorder %s43, %s44
      %p55 = scmp.eq.s32.totalorder %s23, 0
      %p56 = por %p54, %p55
      %p57 = scmp.ne.s32.totalorder %s43, %s44
      %p58 = scmp.eq.s32.totalorder %s24, 1
      %p59 = por %p57, %p58
      %p61 = scmp.ne.s32.totalorder %s44, %s60
      %p62 = scmp.eq.s32.totalorder %s24, 0
      %p63 = por %p61, %p62
      %s64 = ssub.s32 %s25, %s37
      %p65 = scmp.eq.s32.totalorder %s64, 0
      %s67 = sadd.s32 %s66, 1
      %s68 = scalar_select %p65, %s66, %s67
      %p71 = pneg %p65
      %p72 = scmp.eq.s32.totalorder %s18, 1
      %p73 = por %p71, %p72
      %p74 = scmp.ne.s32.totalorder %s66, %s69
      %p75 = scmp.eq.s32.totalorder %s18, 0
      %p76 = por %p74, %p75
      %p77 = scmp.ne.s32.totalorder %s66, %s69
      %p78 = scmp.eq.s32.totalorder %s23, 1
      %p79 = por %p77, %p78
      %p80 = scmp.ne.s32.totalorder %s69, %s70
      %p81 = scmp.eq.s32.totalorder %s23, 0
      %p82 = por %p80, %p81
      %p83 = scmp.ne.s32.totalorder %s69, %s70
      %p84 = scmp.eq.s32.totalorder %s24, 1
      %p85 = por %p83, %p84
      %p87 = scmp.ne.s32.totalorder %s70, %s86
      %p88 = scmp.eq.s32.totalorder %s24, 0
      %p89 = por %p87, %p88
      %s90 = ssub.s32 %s25, %s37
      %s91 = ssub.s32 %s26, %s33
      %s92 = sor.u32 %s90, %s91
      %p93 = scmp.eq.s32.totalorder %s92, 0
      %s95 = sadd.s32 %s94, 1
      %s96 = scalar_select %p93, %s94, %s95
      %p99 = pneg %p93
      %p100 = scmp.eq.s32.totalorder %s18, 1
      %p101 = por %p99, %p100
      %p102 = scmp.ne.s32.totalorder %s94, %s97
      %p103 = scmp.eq.s32.totalorder %s18, 0
      %p104 = por %p102, %p103
      %p105 = scmp.ne.s32.totalorder %s94, %s97
      %p106 = scmp.eq.s32.totalorder %s23, 1
      %p107 = por %p105, %p106
      %p108 = scmp.ne.s32.totalorder %s97, %s98
      %p109 = scmp.eq.s32.totalorder %s23, 0
      %p110 = por %p108, %p109
      %p111 = scmp.ne.s32.totalorder %s97, %s98
      %p112 = scmp.eq.s32.totalorder %s24, 1
      %p113 = por %p111, %p112
      %p115 = scmp.ne.s32.totalorder %s98, %s114
      %p116 = scmp.eq.s32.totalorder %s24, 0
      %p117 = por %p115, %p116
      %s118 = ssub.s32 %s25, %s37
      %s119 = ssub.s32 %s26, %s33
      %s120 = sor.u32 %s118, %s119
      %p121 = scmp.eq.s32.totalorder %s120, 0
      %s123 = sadd.s32 %s122, 1
      %s124 = scalar_select %p121, %s122, %s123
      %p127 = pneg %p121
      %p128 = scmp.eq.s32.totalorder %s18, 1
      %p129 = por %p127, %p128
      %p130 = scmp.ne.s32.totalorder %s122, %s125
      %p131 = scmp.eq.s32.totalorder %s18, 0
      %p132 = por %p130, %p131
      %p133 = scmp.ne.s32.totalorder %s122, %s125
      %p134 = scmp.eq.s32.totalorder %s23, 1
      %p135 = por %p133, %p134
      %p136 = scmp.ne.s32.totalorder %s125, %s126
      %p137 = scmp.eq.s32.totalorder %s23, 0
      %p138 = por %p136, %p137
      %p139 = scmp.ne.s32.totalorder %s125, %s126
      %p140 = scmp.eq.s32.totalorder %s24, 1
      %p141 = por %p139, %p140
      %p143 = scmp.ne.s32.totalorder %s126, %s142
      %p144 = scmp.eq.s32.totalorder %s24, 0
      %p145 = por %p143, %p144
      %p146 = scmp.le.s32.totalorder 1, %s18
      %p147 = scmp.lt.s32.totalorder %s18, 3
      %p148 = pnand %p146, %p147
      %p149 = pneg %p148
      // Predicated region
      $region9: #{tpu_custom_call.1} parent=5 // pred_check
        _
      $region10: #{tpu_custom_call.1} parent=5 // pred_check_branch
        %151 = sbr.rel (%p148) target = $region12
      $region11: #{tpu_custom_call.1} parent=5 // pred_region
        %s152 = ssub.s32 %s18, 1
      $region12: #{tpu_custom_call.1} parent=5 // pred_fallthru
        _
      %p153 = scmp.lt.s32.totalorder %s18, 2
      // Predicated region
      $region13: #{tpu_custom_call.1} parent=5 // pred_check
        %p154 = pneg %p153
      $region14: #{tpu_custom_call.1} parent=5 // pred_check_branch
        %156 = sbr.rel (%p154) target = $region16
      $region15: #{tpu_custom_call.1} parent=5 // pred_region
        // Predicated region
        $region17: #{tpu_custom_call.1} parent=15 // pred_check
          %p157 = pneg %p50
        $region18: #{tpu_custom_call.1} parent=15 // pred_check_branch
          %159 = sbr.rel (%p157) target = $region20
        $region19: #{tpu_custom_call.1} parent=15 // pred_region
          %s160 = sand.u32 %s40, 1
          %s161 = scalar_lea.sflag [#allocation3], %s160
          %s162 = sand.u32 %s40, 1
          %s163 = smul.addr %s162, 4
          %s164 = scalar_lea.vmem [#allocation2], %s163
          %s166 = ssub.s32 64, 64
          %167 = vsyncadd %s161, %s166
          %s168 = smul.addr %s25, 64
          %s169 = scalar_lea.hbm %s0, %s168
          %s171 = sshll.u32 %s164, 4
          %s172 = int_to_ptr.vmem [resolvable:$true] %s171
          %174 = dma.hbm_to_vmem [thread:$0]  %s169, 64, %s172, %s161
        $region20: #{tpu_custom_call.1} parent=15 // pred_fallthru
          _
        // Predicated region
        $region21: #{tpu_custom_call.1} parent=15 // pred_check
          %p175 = pneg %p76
        $region22: #{tpu_custom_call.1} parent=15 // pred_check_branch
          %177 = sbr.rel (%p175) target = $region24
        $region23: #{tpu_custom_call.1} parent=15 // pred_region
          %s178 = sand.u32 %s18, 1
          %s179 = scalar_lea.sflag [#allocation6], %s178
          %s180 = sand.u32 %s66, 1
          %s181 = smul.addr %s180, 8
          %s182 = scalar_lea.vmem [#allocation5], %s181
          %s184 = ssub.s32 128, 128
          %185 = vsyncadd %s179, %s184
          %s186 = smul.addr %s25, 128
          %s187 = scalar_lea.hbm %s1, %s186
          %s189 = sshll.u32 %s182, 4
          %s190 = int_to_ptr.vmem [resolvable:$true] %s189
          %192 = dma.hbm_to_vmem [thread:$0]  %s187, 128, %s190, %s179
        $region24: #{tpu_custom_call.1} parent=15 // pred_fallthru
          _
        // Predicated region
        $region25: #{tpu_custom_call.1} parent=15 // pred_check
          %p193 = pneg %p104
        $region26: #{tpu_custom_call.1} parent=15 // pred_check_branch
          %195 = sbr.rel (%p193) target = $region28
        $region27: #{tpu_custom_call.1} parent=15 // pred_region
          %s196 = sand.u32 %s18, 1
          %s197 = scalar_lea.sflag [#allocation6], %s196
          %s198 = sand.u32 %s94, 1
          %s199 = smul.addr %s198, 128
          %s200 = scalar_lea.vmem [#allocation7], %s199
          %s201 = smul.u32 2, %s26
          %s203 = ssub.s32 2048, 2048
          %204 = vsyncadd %s197, %s203
          %s205 = smul.addr %s25, 32
          %s206 = sadd.s32 %s201, %s205
          %s207 = smul.addr %s206, 64
          %s208 = scalar_lea.hbm %s2, %s207
          %s209 = sshll.u32 %s200, 4
          %s210 = int_to_ptr.vmem [resolvable:$true] %s209
          %215 = dma.hbm_to_vmem [thread:$0]  %s208, 2048, %s210, %s197, 128, 128, 8
        $region28: #{tpu_custom_call.1} parent=15 // pred_fallthru
          _
      $region16: #{tpu_custom_call.1} parent=5 // pred_fallthru
        _
      %p216 = scmp.le.s32.totalorder 1, %s18
      %p217 = scmp.lt.s32.totalorder %s18, 3
      %p218 = pnand %p216, %p217
      %p219 = pneg %p218
      // Predicated region
      $region29: #{tpu_custom_call.1} parent=5 // pred_check
        _
      $region30: #{tpu_custom_call.1} parent=5 // pred_check_branch
        %221 = sbr.rel (%p218) target = $region32
      $region31: #{tpu_custom_call.1} parent=5 // pred_region
        %s222 = ssub.s32 %s18, 1
        %s223 = sand.u32 %s43, 1
        %s224 = scalar_lea.sflag [#allocation3], %s223
        %s225 = sand.u32 %s43, 1
        %s226 = smul.addr %s225, 4
        %s227 = scalar_lea.vmem [#allocation2], %s226
        // Predicated region
        $region33: #{tpu_custom_call.1} parent=31 // pred_check
          %p228 = pneg %p56
        $region34: #{tpu_custom_call.1} parent=31 // pred_check_branch
          %230 = sbr.rel (%p228) target = $region36
        $region35: #{tpu_custom_call.1} parent=31 // pred_region
          %231 = dma.done %s224, 64
        $region36: #{tpu_custom_call.1} parent=31 // pred_fallthru
          _
        %s232 = sand.u32 %s23, 1
        %s233 = scalar_lea.sflag [#allocation6], %s232
        %s234 = sand.u32 %s69, 1
        %s235 = smul.addr %s234, 8
        %s236 = scalar_lea.vmem [#allocation5], %s235
        // Predicated region
        $region37: #{tpu_custom_call.1} parent=31 // pred_check
          %p237 = pneg %p82
        $region38: #{tpu_custom_call.1} parent=31 // pred_check_branch
          %239 = sbr.rel (%p237) target = $region40
        $region39: #{tpu_custom_call.1} parent=31 // pred_region
          %240 = dma.done %s233, 128
        $region40: #{tpu_custom_call.1} parent=31 // pred_fallthru
          _
        %s241 = sand.u32 %s23, 1
        %s242 = scalar_lea.sflag [#allocation6], %s241
        %s243 = sand.u32 %s97, 1
        %s244 = smul.addr %s243, 128
        %s245 = scalar_lea.vmem [#allocation7], %s244
        // Predicated region
        $region41: #{tpu_custom_call.1} parent=31 // pred_check
          %p246 = pneg %p110
        $region42: #{tpu_custom_call.1} parent=31 // pred_check_branch
          %248 = sbr.rel (%p246) target = $region44
        $region43: #{tpu_custom_call.1} parent=31 // pred_region
          %249 = dma.done %s242, 2048
        $region44: #{tpu_custom_call.1} parent=31 // pred_fallthru
          _
        %s250 = sand.u32 %s43, 1
        %s251 = scalar_lea.sflag [#allocation3], %s250
        %s252 = sand.u32 %s43, 1
        %s253 = smul.addr %s252, 4
        %s254 = scalar_lea.vmem [#allocation2], %s253
        %p255 = pneg %p56
        %p256 = pneg %p53
        %s257 = sand.u32 %s23, 1
        %s258 = scalar_lea.sflag [#allocation6], %s257
        %s259 = sand.u32 %s69, 1
        %s260 = smul.addr %s259, 8
        %s261 = scalar_lea.vmem [#allocation5], %s260
        %p262 = pneg %p82
        %p263 = pneg %p79
        %s264 = sand.u32 %s23, 1
        %s265 = scalar_lea.sflag [#allocation6], %s264
        %s266 = sand.u32 %s97, 1
        %s267 = smul.addr %s266, 128
        %s268 = scalar_lea.vmem [#allocation7], %s267
        %p269 = pneg %p110
        %p270 = pneg %p107
        %p271 = pneg %p138
        %p272 = pneg %p135
        %s273 = sand.u32 %s125, 1
        %s274 = scalar_lea.sflag [#allocation4], %s273
        %s275 = sand.u32 %s125, 1
        %s276 = smul.addr %s275, 16
        %s277 = scalar_lea.vmem [#allocation8], %s276
        %s278 = smul.u32 2, %s28
        %s279 = smul.u32 2, %s28
        %v281 = vld [vmem:[%s227] sm:$0xf]
        %v282 = vld [vmem:[%s245] sm:$0xff]
        %v283 = vld [vmem:[%s245 + $0x8] sm:$0xff]
        %v284 = vld [vmem:[%s245 + $0x10] sm:$0xff]
        %v285 = vld [vmem:[%s245 + $0x18] sm:$0xff]
        %v286 = vld [vmem:[%s245 + $0x20] sm:$0xff]
        %v287 = vld [vmem:[%s245 + $0x28] sm:$0xff]
        %v288 = vld [vmem:[%s245 + $0x30] sm:$0xff]
        %v289 = vld [vmem:[%s245 + $0x38] sm:$0xff]
        %v290 = vld [vmem:[%s245 + $0x40] sm:$0xff]
        %v291 = vld [vmem:[%s245 + $0x48] sm:$0xff]
        %v292 = vld [vmem:[%s245 + $0x50] sm:$0xff]
        %v293 = vld [vmem:[%s245 + $0x58] sm:$0xff]
        %v294 = vld [vmem:[%s245 + $0x60] sm:$0xff]
        %v295 = vld [vmem:[%s245 + $0x68] sm:$0xff]
        %v296 = vld [vmem:[%s245 + $0x70] sm:$0xff]
        %v297 = vld [vmem:[%s245 + $0x78] sm:$0xff]
        %v298 = vld [vmem:[%s236] sm:$0xff]
        %300 = vset.pattern.permute.xlu0 0
        %301 = vperm.xlu0 %300, %v298
        %v302 = vpop.permute.xlu0 %301
        %v320 = vunpack.c.l.b16 %v282
        %v321 = vunpack.c.h.b16 %v282
        %v322 = vunpack.c.l.b16 %v283
        %v323 = vunpack.c.h.b16 %v283
        %v324 = vunpack.c.l.b16 %v284
        %v325 = vunpack.c.h.b16 %v284
        %v326 = vunpack.c.l.b16 %v285
        %v327 = vunpack.c.h.b16 %v285
        %v328 = vunpack.c.l.b16 %v286
        %v329 = vunpack.c.h.b16 %v286
        %v330 = vunpack.c.l.b16 %v287
        %v331 = vunpack.c.h.b16 %v287
        %v332 = vunpack.c.l.b16 %v288
        %v333 = vunpack.c.h.b16 %v288
        %v334 = vunpack.c.l.b16 %v289
        %v335 = vunpack.c.h.b16 %v289
        %v336 = vunpack.c.l.b16 %v290
        %v337 = vunpack.c.h.b16 %v290
        %v338 = vunpack.c.l.b16 %v291
        %v339 = vunpack.c.h.b16 %v291
        %v340 = vunpack.c.l.b16 %v292
        %v341 = vunpack.c.h.b16 %v292
        %v342 = vunpack.c.l.b16 %v293
        %v343 = vunpack.c.h.b16 %v293
        %v344 = vunpack.c.l.b16 %v294
        %v345 = vunpack.c.h.b16 %v294
        %v346 = vunpack.c.l.b16 %v295
        %v347 = vunpack.c.h.b16 %v295
        %v348 = vunpack.c.l.b16 %v296
        %v349 = vunpack.c.h.b16 %v296
        %v350 = vunpack.c.l.b16 %v297
        %v351 = vunpack.c.h.b16 %v297
        %v352 = vpack.c.b16 %v322, %v320
        %v353 = vpack.c.b16 %v323, %v321
        %v354 = vpack.c.b16 %v326, %v324
        %v355 = vpack.c.b16 %v327, %v325
        %v356 = vpack.c.b16 %v330, %v328
        %v357 = vpack.c.b16 %v331, %v329
        %v358 = vpack.c.b16 %v334, %v332
        %v359 = vpack.c.b16 %v335, %v333
        %v360 = vpack.c.b16 %v338, %v336
        %v361 = vpack.c.b16 %v339, %v337
        %v362 = vpack.c.b16 %v342, %v340
        %v363 = vpack.c.b16 %v343, %v341
        %v364 = vpack.c.b16 %v346, %v344
        %v365 = vpack.c.b16 %v347, %v345
        %v366 = vpack.c.b16 %v350, %v348
        %v367 = vpack.c.b16 %v351, %v349
        %384 = vmatprep.subr.bf16.mxu0 %v353
        %385 = vmatpush1.bf16.msra.mxu0 %v352
        %386 = vmatprep.subr.bf16.mxu0 %v355
        %387 = vmatpush1.bf16.msra.mxu0 %v354
        %388 = vmatprep.subr.bf16.mxu0 %v357
        %389 = vmatpush1.bf16.msra.mxu0 %v356
        %390 = vmatprep.subr.bf16.mxu0 %v359
        %391 = vmatpush1.bf16.msra.mxu0 %v358
        %392 = vmatprep.subr.bf16.mxu0 %v361
        %393 = vmatpush1.bf16.msra.mxu0 %v360
        %394 = vmatprep.subr.bf16.mxu0 %v363
        %395 = vmatpush1.bf16.msra.mxu0 %v362
        %396 = vmatprep.subr.bf16.mxu0 %v365
        %397 = vmatpush1.bf16.msra.mxu0 %v364
        %398 = vmatprep.subr.bf16.mxu0 %v367
        %399 = vmatpush1.bf16.msra.mxu0 %v366
        %400 = vmatprep.subr.bf16.mxu0 0
        %401 = vmatpush1.bf16.msra.mxu0 0
        %402 = vmatprep.subr.bf16.mxu0 0
        %403 = vmatpush1.bf16.msra.mxu0 0
        %404 = vmatprep.subr.bf16.mxu0 0
        %405 = vmatpush1.bf16.msra.mxu0 0
        %406 = vmatprep.subr.bf16.mxu0 0
        %407 = vmatpush1.bf16.msra.mxu0 0
        %408 = vmatprep.subr.bf16.mxu0 0
        %409 = vmatpush1.bf16.msra.mxu0 0
        %410 = vmatprep.subr.bf16.mxu0 0
        %411 = vmatpush1.bf16.msra.mxu0 0
        %412 = vmatprep.subr.bf16.mxu0 0
        %413 = vmatpush1.bf16.msra.mxu0 0
        %414 = vmatprep.subr.bf16.mxu0 0
        %415 = vmatpush1.bf16.msra.mxu0 0
        %416 = vmatprep.mubr.bf16.mxu0 0
        %417 = vmatmul.mubr.bf16.gmra.mrb[0].mxu0 %v281
        %v418 = vpop.f32.mrb[0].mxu0
        %v419 = vadd.f32 %v302, %v418
        %v420 = vpop.f32.mrb[0].mxu0
        %v421 = vadd.f32 %v302, %v420
        %v422 = vpop.f32.mrb[0].mxu0
        %v423 = vpop.f32.mrb[0].mxu0
        %424 = vdwg.mxu0
        %425 = vst [vmem:[%s277] sm:$0xff] %v419
        %426 = vst [vmem:[%s277 + $0x8] sm:$0xff] %v421
        %s427 = sand.u32 %s125, 1
        %s428 = scalar_lea.sflag [#allocation4], %s427
        %s429 = sand.u32 %s125, 1
        %s430 = smul.addr %s429, 16
        %s431 = scalar_lea.vmem [#allocation8], %s430
        // Predicated region
        $region45: #{tpu_custom_call.1} parent=31 // pred_check
          %p432 = pneg %p135
        $region46: #{tpu_custom_call.1} parent=31 // pred_check_branch
          %434 = sbr.rel (%p432) target = $region48
        $region47: #{tpu_custom_call.1} parent=31 // pred_region
          %s435 = smul.u32 2, %s28
          %s437 = ssub.s32 256, 256
          %438 = vsyncadd %s428, %s437
          %s439 = smul.addr %s27, 2
          %s440 = sadd.s32 %s435, %s439
          %s441 = smul.addr %s440, 128
          %s442 = scalar_lea.hbm %s3, %s441
          %s444 = sshll.u32 %s431, 4
          %s445 = int_to_ptr.vmem [resolvable:$true] %s444
          %447 = dma.vmem_to_hbm [thread:$0]  %s445, 256, %s442, %s428
        $region48: #{tpu_custom_call.1} parent=31 // pred_fallthru
          _
      $region32: #{tpu_custom_call.1} parent=5 // pred_fallthru
        _
      %p448 = scmp.le.s32.totalorder 2, %s18
      // Predicated region
      $region49: #{tpu_custom_call.1} parent=5 // pred_check
        %p449 = pneg %p448
      $region50: #{tpu_custom_call.1} parent=5 // pred_check_branch
        %451 = sbr.rel (%p449) target = $region52
      $region51: #{tpu_custom_call.1} parent=5 // pred_region
        %s452 = ssub.s32 %s18, 2
        // Predicated region
        $region53: #{tpu_custom_call.1} parent=51 // pred_check
          %p453 = pneg %p141
        $region54: #{tpu_custom_call.1} parent=51 // pred_check_branch
          %455 = sbr.rel (%p453) target = $region56
        $region55: #{tpu_custom_call.1} parent=51 // pred_region
          %s456 = sand.u32 %s126, 1
          %s457 = scalar_lea.sflag [#allocation4], %s456
          %s458 = sand.u32 %s126, 1
          %s459 = smul.addr %s458, 16
          %s460 = scalar_lea.vmem [#allocation8], %s459
          %461 = dma.done %s457, 256
        $region56: #{tpu_custom_call.1} parent=51 // pred_fallthru
          _
      $region52: #{tpu_custom_call.1} parent=5 // pred_fallthru
        _
    $region6: #{tpu_custom_call.1} parent=1 // loop_footer
      %s22 = sadd.s32 1, %s18
    $region7: #{tpu_custom_call.1} parent=1 // loop_footer_branch
      %17 = sbr.rel target = $region3
    $region8: #{tpu_custom_call.1} parent=1 // loop_exit
      _
    %462 = vsyncpa [#allocation3], 1
    %s463 = scalar_lea.sflag [#allocation3], 1
    %464 = vsyncpa %s463, 1
    %465 = vsyncpa [#allocation6], 1
    %s466 = scalar_lea.sflag [#allocation6], 1
    %467 = vsyncpa %s466, 1
    %468 = vsyncpa [#allocation4], 1
    %s469 = scalar_lea.sflag [#allocation4], 1
    %470 = vsyncpa %s469, 1

</llo_original>
